<compile_context>
chip_gen: v6e
topology: v6e:2x2x1
jax: 0.10.0
libtpu: 0.0.40
codegen_flags: <defaults>
</compile_context>

<pallas_src>
import functools

import jax
import jax.numpy as jnp
from jax.experimental import pallas as pl
from jax.experimental.pallas import tpu as pltpu

_MIB = 1 << 20

# Per-generation: (per-buffer hidden-tile budget, vmem_limit_bytes cap).
_GEN_CFG = {
    "v5e": (6 * _MIB, 100 * _MIB),   # 16 MiB default scope, 128 MiB physical
    "v6e": (16 * _MIB, 100 * _MIB),  # 32 MiB default scope, 128 MiB physical
    "v7x": (14 * _MIB, 48 * _MIB),   # 32 MiB default scope,  64 MiB physical
    "unknown": (8 * _MIB, 48 * _MIB),
}


# ---------------------------------------------------------------------------
# Kernels
# ---------------------------------------------------------------------------

def _cls_kernel(pooled_ref, w_ref, b_ref, out_ref):
    """CLS pooling + classifier.  pooled_ref: (bt, H), w_ref: (H, Lp),
    b_ref: (1, Lp), out_ref: (bt, Lp)."""
    pooled = pooled_ref[...].astype(jnp.float32)
    out_ref[...] = (
        jnp.dot(pooled, w_ref[...], preferred_element_type=jnp.float32)
        + b_ref[...]
    )


def _mean_kernel(hidden_ref, mask_ref, w_ref, b_ref, out_ref, acc_ref, lens_ref,
                 *, native_mul):
    """Masked mean pooling + classifier, tiled over (B, S).

    hidden_ref: (bt, st, H) native dtype (bf16/f32)
    mask_ref:   (bt, st, 1) f32  (S on sublanes -> broadcast is a lane splat)
    w_ref:      (H, Lp)     f32 (resident)
    b_ref:      (1, Lp)     f32 (resident)
    out_ref:    (bt, Lp)    f32 (resident across the S axis)
    acc_ref:    (bt, H)     f32 scratch (masked hidden sum)
    lens_ref:   (bt, 1)     f32 scratch (mask sum)
    """
    j = pl.program_id(1)

    @pl.when(j == 0)
    def _():
        acc_ref[...] = jnp.zeros_like(acc_ref)
        lens_ref[...] = jnp.zeros_like(lens_ref)

    h = hidden_ref[...]                                    # (bt, st, H)
    m = mask_ref[...]                                      # (bt, st, 1) f32
    if native_mul:
        # 0/1 mask is exact in bf16; halves the multiply vregs (v6e/v7x),
        # keeping the tile VALU work under the HBM stream.
        hm = (h * m.astype(h.dtype)).astype(jnp.float32)
    else:
        # f32 path (v5e has no bf16 VPU ops).
        hm = h.astype(jnp.float32) * m
    acc_ref[...] += jnp.sum(hm, axis=1)                    # (bt, H)
    lens_ref[...] += jnp.sum(m, axis=1)                    # (bt, 1)

    @pl.when(j == pl.num_programs(1) - 1)
    def _():
        # Exact divide once per output tile (matches torch semantics incl.
        # NaN for an all-zero mask row; no clamp — intentional).
        pooled = acc_ref[...] / lens_ref[...]              # (bt, H)
        out_ref[...] = (
            jnp.dot(pooled, w_ref[...], preferred_element_type=jnp.float32)
            + b_ref[...]
        )


def _mean_nomask_kernel(hidden_ref, w_ref, b_ref, out_ref, acc_ref, *, seq_len):
    """Plain mean over S + classifier (attention_mask=None): no mask DMA and
    no mask multiply — streaming sum, divide by S at finalize."""
    j = pl.program_id(1)

    @pl.when(j == 0)
    def _():
        acc_ref[...] = jnp.zeros_like(acc_ref)

    acc_ref[...] += jnp.sum(hidden_ref[...].astype(jnp.float32), axis=1)

    @pl.when(j == pl.num_programs(1) - 1)
    def _():
        pooled = acc_ref[...] / jnp.float32(seq_len)       # (bt, H)
        out_ref[...] = (
            jnp.dot(pooled, w_ref[...], preferred_element_type=jnp.float32)
            + b_ref[...]
        )


# ---------------------------------------------------------------------------
# Tiling / generation helpers
# ---------------------------------------------------------------------------

def _tpu_generation():
    try:
        kind = jax.devices()[0].device_kind.lower()
    except Exception:
        return "unknown"
    if "7" in kind:
        return "v7x"
    if "v6" in kind or "6e" in kind:
        return "v6e"
    if "v5" in kind or "5e" in kind or "5p" in kind:
        return "v5e"
    return "unknown"


def _pick_batch_tile(B, H, itemsize, budget):
    """Batch tile: multiple of 8 when possible (output-block constraint),
    >=2 grid tiles so the 'parallel' axis can split across v7x's two TCs,
    small enough that a >=256-row seq tile can still fit the budget."""
    if B % 8 != 0:
        return B
    cands = [c for c in (32, 16, 8) if B % c == 0 and B // c >= 2] or [8]
    for c in cands:
        if c * 256 * H * itemsize <= budget:
            return c
    return cands[-1]


def _pick_seq_tile(S, bt, H, itemsize, budget):
    """Largest multiple-of-8 divisor of S whose (bt, st, H) hidden tile fits
    the per-buffer VMEM budget; falls back to full S for small/awkward S."""
    if S % 8 != 0:
        return S
    max_rows = budget // max(1, bt * H * itemsize)
    max_rows = min(S, max(8, (max_rows // 8) * 8))
    for st in range(int(max_rows), 7, -8):
        if S % st == 0:
            return st
    return S


def _pick_cls_batch_tile(B):
    if B <= 256:
        return B
    for cand in (256, 128, 64, 32, 16, 8):
        if B % cand == 0:
            return cand
    return B


# ---------------------------------------------------------------------------
# Wrapper
# ---------------------------------------------------------------------------

def freeze_lm_with_classifier(last_hidden, attention_mask, weight, bias,
                              *, pooling="cls"):
    """Replicates FreezeLMWithClassifier.forward given the LM's last hidden
    states.

    last_hidden:    (B, S, H)  bf16 or f32 (kept in native dtype on the wire)
    attention_mask: (B, S) or None (mean mode: None -> plain mean over S)
    weight:         (L, H)     nn.Linear.weight layout
    bias:           (L,)
    returns logits: (B, L)     f32
    """
    B, S, H = last_hidden.shape
    L = weight.shape[0]
    Lp = pl.cdiv(L, 128) * 128                          # lane-dense label dim

    gen = _tpu_generation()
    budget, vmem_cap = _GEN_CFG[gen]
    itemsize = jnp.dtype(last_hidden.dtype).itemsize

    w_pad = jnp.pad(jnp.asarray(weight, jnp.float32).T, ((0, 0), (0, Lp - L)))
    b_pad = jnp.pad(jnp.asarray(bias, jnp.float32), (0, Lp - L)).reshape(1, Lp)
    w_bytes = H * Lp * 4
    b_bytes = 8 * Lp * 4                                # sublane-padded in VMEM

    if pooling == "cls":
        bt = _pick_cls_batch_tile(B)
        # Only the CLS tokens cross HBM: B*H elements instead of B*S*H.
        cls_tok = last_hidden[:, 0, :]                  # (B, H), native dtype
        need = (2 * bt * H * itemsize + 2 * w_bytes + 2 * b_bytes
                + 2 * bt * Lp * 4)
        vmem_limit = int(min(vmem_cap, max(need + 2 * _MIB, 16 * _MIB)))
        out = pl.pallas_call(
            _cls_kernel,
            out_shape=jax.ShapeDtypeStruct((B, Lp), jnp.float32),
            grid_spec=pltpu.PrefetchScalarGridSpec(
                num_scalar_prefetch=0,
                grid=(B // bt,),
                in_specs=[
                    pl.BlockSpec((bt, H), lambda i: (i, 0)),
                    pl.BlockSpec((H, Lp), lambda i: (0, 0)),   # resident
                    pl.BlockSpec((1, Lp), lambda i: (0, 0)),   # resident
                ],
                out_specs=pl.BlockSpec((bt, Lp), lambda i: (i, 0)),
            ),
            compiler_params=pltpu.CompilerParams(
                dimension_semantics=("parallel",),
                vmem_limit_bytes=vmem_limit),
        )(cls_tok, w_pad, b_pad)

    elif pooling == "mean":
        bt = _pick_batch_tile(B, H, itemsize, budget)
        st = _pick_seq_tile(S, bt, H, itemsize, budget)

        hidden_tile = bt * st * H * itemsize
        out_tile = bt * Lp * 4
        scratch_bytes = bt * H * 4 + 8 * 128 * 4
        mask_hbm_bytes = 0 if attention_mask is None else B * S * 4
        cost = pl.CostEstimate(
            flops=int(2 * B * S * H + 2 * B * H * Lp),
            transcendentals=0,
            bytes_accessed=int(B * S * H * itemsize + mask_hbm_bytes
                               + w_bytes + b_bytes + B * Lp * 4))

        if attention_mask is None:
            need = (2 * hidden_tile + 2 * w_bytes + 2 * b_bytes
                    + 2 * out_tile + scratch_bytes)
            vmem_limit = int(min(vmem_cap, max(need + 4 * _MIB, 16 * _MIB)))
            kernel = functools.partial(_mean_nomask_kernel, seq_len=float(S))
            out = pl.pallas_call(
                kernel,
                out_shape=jax.ShapeDtypeStruct((B, Lp), jnp.float32),
                grid_spec=pltpu.PrefetchScalarGridSpec(
                    num_scalar_prefetch=0,
                    grid=(B // bt, S // st),
                    in_specs=[
                        pl.BlockSpec((bt, st, H), lambda i, j: (i, j, 0)),
                        pl.BlockSpec((H, Lp), lambda i, j: (0, 0)),
                        pl.BlockSpec((1, Lp), lambda i, j: (0, 0)),
                    ],
                    out_specs=pl.BlockSpec((bt, Lp), lambda i, j: (i, 0)),
                    scratch_shapes=[pltpu.VMEM((bt, H), jnp.float32)],
                ),
                compiler_params=pltpu.CompilerParams(
                    dimension_semantics=("parallel", "arbitrary"),
                    vmem_limit_bytes=vmem_limit),
                cost_estimate=cost,
            )(last_hidden, w_pad, b_pad)
        else:
            # Mask as (B, S, 1): S on sublanes (same as the hidden tile), so
            # the in-kernel broadcast over H is a lane splat, not an XLU
            # relayout, and st only needs to be a multiple of 8.
            mask = attention_mask.astype(jnp.float32).reshape(B, S, 1)
            mask_tile_vmem = bt * st * 128 * 4          # lane dim 1 pads to 128
            need = (2 * hidden_tile + 2 * mask_tile_vmem + 2 * w_bytes
                    + 2 * b_bytes + 2 * out_tile + scratch_bytes)
            vmem_limit = int(min(vmem_cap, max(need + 4 * _MIB, 16 * _MIB)))
            native_mul = (last_hidden.dtype != jnp.float32) and (gen != "v5e")
            kernel = functools.partial(_mean_kernel, native_mul=native_mul)
            out = pl.pallas_call(
                kernel,
                out_shape=jax.ShapeDtypeStruct((B, Lp), jnp.float32),
                grid_spec=pltpu.PrefetchScalarGridSpec(
                    num_scalar_prefetch=0,
                    grid=(B // bt, S // st),
                    in_specs=[
                        pl.BlockSpec((bt, st, H), lambda i, j: (i, j, 0)),
                        pl.BlockSpec((bt, st, 1), lambda i, j: (i, j, 0)),
                        pl.BlockSpec((H, Lp), lambda i, j: (0, 0)),   # resident
                        pl.BlockSpec((1, Lp), lambda i, j: (0, 0)),   # resident
                    ],
                    out_specs=pl.BlockSpec((bt, Lp), lambda i, j: (i, 0)),
                    scratch_shapes=[
                        pltpu.VMEM((bt, H), jnp.float32),  # masked-sum accum
                        pltpu.VMEM((bt, 1), jnp.float32),  # mask-length accum
                    ],
                ),
                compiler_params=pltpu.CompilerParams(
                    dimension_semantics=("parallel", "arbitrary"),
                    vmem_limit_bytes=vmem_limit),
                cost_estimate=cost,
            )(last_hidden, mask, w_pad, b_pad)
    else:
        raise ValueError("Unknown pooling method")

    return out[:, :L]


# ---------------------------------------------------------------------------
# Reference + test
# ---------------------------------------------------------------------------

def _reference(last_hidden, attention_mask, weight, bias, pooling):
    lh = last_hidden.astype(jnp.float32)
    if pooling == "cls":
        pooled = lh[:, 0, :]
    else:
        if attention_mask is not None:
            m = attention_mask[:, :, None].astype(jnp.float32)
            pooled = (lh * m).sum(1) / m.sum(1)
        else:
            pooled = lh.mean(1)
    return pooled @ weight.T + bias


if __name__ == "__main__":
    # Small shapes consistent with the module: batch=2, seq=8, hidden=32, labels=2.
    B, S, H, L = 2, 8, 32, 2
    key = jax.random.PRNGKey(0)
    k_h, k_w, k_b, k_m = jax.random.split(key, 4)

    # Stand-in for outputs.hidden_states[-1] of the frozen LM.
    last_hidden = jax.random.normal(k_h, (B, S, H), dtype=jnp.float32)
    attention_mask = (jax.random.uniform(k_m, (B, S)) > 0.2).astype(jnp.float32)
    attention_mask = attention_mask.at[:, 0].set(1.0)  # keep CLS position valid

    # Classifier params (nn.Linear(hidden_size, num_labels)).
    weight = jax.random.normal(k_w, (L, H), dtype=jnp.float32) * 0.02
    bias = jax.random.normal(k_b, (L,), dtype=jnp.float32) * 0.01

    # f32 path: cls, masked mean, unmasked mean.
    logits_cls = freeze_lm_with_classifier(
        last_hidden, attention_mask, weight, bias, pooling="cls")
    logits_mean = freeze_lm_with_classifier(
        last_hidden, attention_mask, weight, bias, pooling="mean")
    logits_mean_nomask = freeze_lm_with_classifier(
        last_hidden, None, weight, bias, pooling="mean")
    jax.block_until_ready(logits_cls)
    jax.block_until_ready(logits_mean)
    jax.block_until_ready(logits_mean_nomask)

    ref_cls = _reference(last_hidden, attention_mask, weight, bias, "cls")
    ref_mean = _reference(last_hidden, attention_mask, weight, bias, "mean")
    ref_mean_nomask = _reference(last_hidden, None, weight, bias, "mean")

    assert logits_cls.shape == (B, L) and logits_mean.shape == (B, L)
    assert logits_mean_nomask.shape == (B, L)
    assert jnp.allclose(logits_cls, ref_cls, atol=1e-5, rtol=1e-5)
    assert jnp.allclose(logits_mean, ref_mean, atol=1e-5, rtol=1e-5)
    assert jnp.allclose(logits_mean_nomask, ref_mean_nomask, atol=1e-5, rtol=1e-5)

    # bf16-on-the-wire path (native LM dtype): exercises the native-dtype mask
    # multiply (v6e/v7x) / f32 fallback (v5e); check it runs and stays close.
    lh_bf16 = last_hidden.astype(jnp.bfloat16)
    logits_bf16 = freeze_lm_with_classifier(
        lh_bf16, attention_mask, weight, bias, pooling="mean")
    jax.block_until_ready(logits_bf16)
    assert logits_bf16.shape == (B, L)
    assert jnp.allclose(logits_bf16, ref_mean, atol=5e-2, rtol=5e-2)

    print("KERNEL_OK")
</pallas_src>

<mosaic_0001>
module attributes {stable_mosaic.version = 11 : i64} {
  func.func @_cls_kernel(%arg0: i32, %arg1: memref<2x32xf32, #tpu.memory_space<vmem>>, %arg2: memref<32x128xf32, #tpu.memory_space<vmem>>, %arg3: memref<1x128xf32, #tpu.memory_space<vmem>>, %arg4: memref<2x128xf32, #tpu.memory_space<vmem>>) attributes {dimension_semantics = [#tpu.dimension_semantics<parallel>], iteration_bounds = array<i64: 1>, scalar_prefetch = 0 : i64, scratch_operands = 0 : i64, tpu.core_type = #tpu.core_type<tc>, window_params = [{transform_indices = @transform_0, window_bounds = array<i64: 2, 32>}, {pipeline_mode = #tpu.pipeline_mode<synchronous>, transform_indices = @transform_1, window_bounds = array<i64: 32, 128>}, {pipeline_mode = #tpu.pipeline_mode<synchronous>, transform_indices = @transform_2, window_bounds = array<i64: 1, 128>}, {transform_indices = @transform_3, window_bounds = array<i64: 2, 128>}]} {
    %c0 = arith.constant 0 : index
    %c0_0 = arith.constant 0 : index
    %0 = vector.load %arg1[%c0, %c0_0] : memref<2x32xf32, #tpu.memory_space<vmem>>, vector<2x32xf32>
    %c0_1 = arith.constant 0 : index
    %c0_2 = arith.constant 0 : index
    %1 = vector.load %arg2[%c0_1, %c0_2] : memref<32x128xf32, #tpu.memory_space<vmem>>, vector<32x128xf32>
    %cst = arith.constant dense<0.000000e+00> : vector<2x128xf32>
    %2 = tpu.matmul %0, %1, %cst {dimension_numbers = #tpu.dot_dimension_numbers<[1], [0], [0], [1], [0, 0, 1, 1], [], []>} : vector<2x32xf32>, vector<32x128xf32>, vector<2x128xf32> -> vector<2x128xf32>
    %c0_3 = arith.constant 0 : index
    %c0_4 = arith.constant 0 : index
    %3 = vector.load %arg3[%c0_3, %c0_4] : memref<1x128xf32, #tpu.memory_space<vmem>>, vector<1x128xf32>
    %4 = vector.broadcast %3 : vector<1x128xf32> to vector<2x128xf32>
    %5 = arith.addf %2, %4 : vector<2x128xf32>
    %c0_5 = arith.constant 0 : index
    %c0_6 = arith.constant 0 : index
    %6 = vector.load %arg4[%c0_5, %c0_6] : memref<2x128xf32, #tpu.memory_space<vmem>>, vector<2x128xf32>
    tpu.vector_store %arg4[%c0_5, %c0_6], %5 {strides = array<i32>} : memref<2x128xf32, #tpu.memory_space<vmem>>, vector<2x128xf32>,
    return
  }
  func.func @transform_0(%arg0: i32) -> (i32, i32) {
    %c0_i32 = arith.constant 0 : i32
    %c0_i32_0 = arith.constant 0 : i32
    return %arg0, %c0_i32 : i32, i32
  }
  func.func @transform_1(%arg0: i32) -> (i32, i32) {
    %c0_i32 = arith.constant 0 : i32
    %c0_i32_0 = arith.constant 0 : i32
    %c0_i32_1 = arith.constant 0 : i32
    return %c0_i32, %c0_i32_0 : i32, i32
  }
  func.func @transform_2(%arg0: i32) -> (i32, i32) {
    %c0_i32 = arith.constant 0 : i32
    %c0_i32_0 = arith.constant 0 : i32
    %c0_i32_1 = arith.constant 0 : i32
    return %c0_i32, %c0_i32_0 : i32, i32
  }
  func.func @transform_3(%arg0: i32) -> (i32, i32) {
    %c0_i32 = arith.constant 0 : i32
    %c0_i32_0 = arith.constant 0 : i32
    return %arg0, %c0_i32 : i32, i32
  }
}

</mosaic_0001>

<llo_original>
// kernel: tpu_custom_call.1
$region0: #{tpu_custom_call.1}
  #allocation0 [shape = 'u32[]', space=smem, size = 0x4, offset = 0x4, fixed_abs, tag = 'smem constant byte address 0x4 - core index']
  #allocation1 [shape = 'u32[144,128]{1,0:T(1,128)}', space=vmem, size = 0x12000, scoped, tag = 'internal scratch']
  %s0 = inlined_call_operand.hbm [shape: f32[2,32], index: 0, kind: input, shape index: {}]
  %s1 = inlined_call_operand.hbm [shape: f32[32,128], index: 1, kind: input, shape index: {}]
  %s2 = inlined_call_operand.vmem [shape: f32[1,128], index: 2, kind: input, shape index: {}]
  %s3 = inlined_call_operand.hbm [shape: f32[2,128], index: 3, kind: output, shape index: {}]
  %s4 = sld [smem:[#allocation0]]
  $region30: #{tpu_custom_call.1} parent=0
    _
  %s6 = ssub.s32 1, %s4
  %s7 = scalar_select 0, %s6, %s4
  $region1: #{tpu_custom_call.1} parent=0
    #allocation2 [shape = 'u8[1024]{0}', space=vmem, size = 0x400, scoped, tag = 'input window, operand 0, single buffered']
    #allocation3 [shape = 's32[1]{0}', space=sflag, size = 0x4, scoped, tag = 'scoped memory for tpu_custom_call.1']
    #allocation4 [shape = 's32[1]{0}', space=sflag, size = 0x4, scoped, tag = 'scoped memory for tpu_custom_call.1']
    #allocation5 [shape = 'u8[16384]{0}', space=vmem, size = 0x4000, scoped, tag = 'input window, operand 1, single buffered']
    #allocation6 [shape = 's32[1]{0}', space=sflag, size = 0x4, scoped, tag = 'scoped memory for tpu_custom_call.1']
    #allocation7 [shape = 'u8[1024]{0}', space=vmem, size = 0x400, scoped, tag = 'output window, operand 0, single buffered']
    %8 = vsyncpa [#allocation3], 0
    %9 = vsyncpa [#allocation6], 0
    %10 = vsyncpa [#allocation4], 0
    // Predicated region
    $region2: #{tpu_custom_call.1} parent=1 // pred_check
      _
    $region3: #{tpu_custom_call.1} parent=1 // pred_check_branch
      %12 = sbr.rel (0) target = $region5
    $region4: #{tpu_custom_call.1} parent=1 // pred_region
      %s14 = ssub.s32 32, 32
      %15 = vsyncadd [#allocation3], %s14
      %s17 = sshll.u32 [#allocation2], 4
      %s18 = int_to_ptr.vmem [resolvable:$true] %s17
      %20 = dma.hbm_to_vmem [thread:$0]  %s0, 32, %s18, [#allocation3]
    $region5: #{tpu_custom_call.1} parent=1 // pred_fallthru
      _
    // Predicated region
    $region6: #{tpu_custom_call.1} parent=1 // pred_check
      _
    $region7: #{tpu_custom_call.1} parent=1 // pred_check_branch
      %22 = sbr.rel (0) target = $region9
    $region8: #{tpu_custom_call.1} parent=1 // pred_region
      %s24 = ssub.s32 512, 512
      %25 = vsyncadd [#allocation6], %s24
      %s26 = sshll.u32 [#allocation5], 4
      %s27 = int_to_ptr.vmem [resolvable:$true] %s26
      %32 = dma.hbm_to_vmem [thread:$0]  %s1, 512, %s27, [#allocation6], 128, 128, 8
    $region9: #{tpu_custom_call.1} parent=1 // pred_fallthru
      _
    // Predicated region
    $region10: #{tpu_custom_call.1} parent=1 // pred_check
      _
    $region11: #{tpu_custom_call.1} parent=1 // pred_check_branch
      %34 = sbr.rel (0) target = $region13
    $region12: #{tpu_custom_call.1} parent=1 // pred_region
      _
    $region13: #{tpu_custom_call.1} parent=1 // pred_fallthru
      _
    // Predicated region
    $region14: #{tpu_custom_call.1} parent=1 // pred_check
      _
    $region15: #{tpu_custom_call.1} parent=1 // pred_check_branch
      %36 = sbr.rel (0) target = $region17
    $region16: #{tpu_custom_call.1} parent=1 // pred_region
      %37 = dma.done [#allocation3], 32
    $region17: #{tpu_custom_call.1} parent=1 // pred_fallthru
      _
    // Predicated region
    $region18: #{tpu_custom_call.1} parent=1 // pred_check
      _
    $region19: #{tpu_custom_call.1} parent=1 // pred_check_branch
      %39 = sbr.rel (0) target = $region21
    $region20: #{tpu_custom_call.1} parent=1 // pred_region
      %40 = dma.done [#allocation6], 512
    $region21: #{tpu_custom_call.1} parent=1 // pred_fallthru
      _
    %v41 = vld [vmem:[#allocation2] sm:$0x3]
    %v42 = vld [vmem:[#allocation5] sm:$0xff]
    %v43 = vld [vmem:[#allocation5 + $0x8] sm:$0xff]
    %v44 = vld [vmem:[#allocation5 + $0x10] sm:$0xff]
    %v45 = vld [vmem:[#allocation5 + $0x18] sm:$0xff]
    %v46 = vld [vmem:[%s2] sm:$0x1]
    %v48 = vlaneseq
    %v49 = vshrl.u32 %v48, 7
    %v50 = vsub.s32 0, %v49
    %v51 = vrot.slane %v46, %v50
    %vm53 = vcmask 261120
    %v55 = vsel %vm53, %v41, 0
    %57 = vmatprep.subr.mxu0 0.0
    %58 = vmatpush1.msra.mxu0 0.0
    %59 = vmatprep.subr.mxu0 0.0
    %60 = vmatpush1.msra.mxu0 0.0
    %61 = vmatprep.subr.mxu0 0.0
    %62 = vmatpush1.msra.mxu0 0.0
    %63 = vmatprep.subr.mxu0 0.0
    %64 = vmatpush1.msra.mxu0 0.0
    %65 = vmatprep.subr.mxu0 0.0
    %66 = vmatpush1.msra.mxu0 0.0
    %67 = vmatprep.subr.mxu0 0.0
    %68 = vmatpush1.msra.mxu0 0.0
    %69 = vmatprep.subr.mxu0 0.0
    %70 = vmatpush1.msra.mxu0 0.0
    %71 = vmatprep.subr.mxu0 0.0
    %72 = vmatpush1.msra.mxu0 0.0
    %73 = vmatprep.subr.mxu0 0.0
    %74 = vmatpush1.msra.mxu0 0.0
    %75 = vmatprep.subr.mxu0 0.0
    %76 = vmatpush1.msra.mxu0 0.0
    %77 = vmatprep.subr.mxu0 0.0
    %78 = vmatpush1.msra.mxu0 0.0
    %79 = vmatprep.subr.mxu0 0.0
    %80 = vmatpush1.msra.mxu0 0.0
    %81 = vmatprep.subr.mxu0 0.0
    %82 = vmatpush1.msra.mxu0 %v45
    %83 = vmatprep.subr.mxu0 0.0
    %84 = vmatpush1.msra.mxu0 %v44
    %85 = vmatprep.subr.mxu0 0.0
    %86 = vmatpush1.msra.mxu0 %v43
    %87 = vmatprep.subr.mxu0 0.0
    %88 = vmatpush1.msra.mxu0 %v42
    %89 = vmatprep.subr.mxu0 0.0
    %90 = vmatpush2.msra.mxu0 0.0
    %91 = vmatprep.subr.mxu0 0.0
    %92 = vmatpush2.msra.mxu0 0.0
    %93 = vmatprep.subr.mxu0 0.0
    %94 = vmatpush2.msra.mxu0 0.0
    %95 = vmatprep.subr.mxu0 0.0
    %96 = vmatpush2.msra.mxu0 0.0
    %97 = vmatprep.subr.mxu0 0.0
    %98 = vmatpush2.msra.mxu0 0.0
    %99 = vmatprep.subr.mxu0 0.0
    %100 = vmatpush2.msra.mxu0 0.0
    %101 = vmatprep.subr.mxu0 0.0
    %102 = vmatpush2.msra.mxu0 0.0
    %103 = vmatprep.subr.mxu0 0.0
    %104 = vmatpush2.msra.mxu0 0.0
    %105 = vmatprep.subr.mxu0 0.0
    %106 = vmatpush2.msra.mxu0 0.0
    %107 = vmatprep.subr.mxu0 0.0
    %108 = vmatpush2.msra.mxu0 0.0
    %109 = vmatprep.subr.mxu0 0.0
    %110 = vmatpush2.msra.mxu0 0.0
    %111 = vmatprep.subr.mxu0 0.0
    %112 = vmatpush2.msra.mxu0 0.0
    %113 = vmatprep.subr.mxu0 0.0
    %114 = vmatpush2.msra.mxu0 0.0
    %115 = vmatprep.subr.mxu0 0.0
    %116 = vmatpush2.msra.mxu0 0.0
    %117 = vmatprep.subr.mxu0 0.0
    %118 = vmatpush2.msra.mxu0 0.0
    %119 = vmatprep.subr.mxu0 0.0
    %120 = vmatpush2.msra.mxu0 0.0
    %121 = vmatprep.mubr.f32.mxu0 0.0
    %122 = vmatmul.mubr.f32.gmra.mxu0 %v55
    %v123 = vpop.f32.mrf.mxu0
    %v124 = vadd.f32 %v51, %v123
    %v125 = vpop.f32.mrf.mxu0
    %126 = vdwg.mxu0
    %127 = vst [vmem:[#allocation7] sm:$0x3] %v124
    // Predicated region
    $region22: #{tpu_custom_call.1} parent=1 // pred_check
      _
    $region23: #{tpu_custom_call.1} parent=1 // pred_check_branch
      %129 = sbr.rel (0) target = $region25
    $region24: #{tpu_custom_call.1} parent=1 // pred_region
      %s131 = ssub.s32 32, 32
      %132 = vsyncadd [#allocation4], %s131
      %s134 = sshll.u32 [#allocation7], 4
      %s135 = int_to_ptr.vmem [resolvable:$true] %s134
      %137 = dma.vmem_to_hbm [thread:$0]  %s135, 32, %s3, [#allocation4]
    $region25: #{tpu_custom_call.1} parent=1 // pred_fallthru
      _
    // Predicated region
    $region26: #{tpu_custom_call.1} parent=1 // pred_check
      _
    $region27: #{tpu_custom_call.1} parent=1 // pred_check_branch
      %139 = sbr.rel (0) target = $region29
    $region28: #{tpu_custom_call.1} parent=1 // pred_region
      %140 = dma.done [#allocation4], 32
    $region29: #{tpu_custom_call.1} parent=1 // pred_fallthru
      _
    %141 = vsyncpa [#allocation3], 1
    %142 = vsyncpa [#allocation6], 1
    %143 = vsyncpa [#allocation4], 1

</llo_original>
